<compile_context>
chip_gen: v5e
topology: v5e:2x2
jax: 0.10.0
libtpu: 0.0.40
codegen_flags: <defaults>
</compile_context>

<pallas_src>
import jax
import jax.numpy as jnp
from jax import lax
from jax.experimental import pallas as pl
from jax.experimental.pallas import tpu as pltpu


def _dir_sim_kernel(img1_ref, img2_ref, txt1_ref, txt2_ref, out_ref):
    # eps=1e-8 in F.cosine_similarity; torch clamps the squared-norm product
    # at eps^2 before the sqrt.
    eps_sq = jnp.float32(1e-16)

    def inv_norm(x):
        # 1/||row||; matches torch `x / x.norm(dim=1, keepdim=True)` (no eps
        # clamp: an all-zero row yields Inf/NaN exactly like the module).
        # rsqrt goes to the EUP slot; no VPU divide chain.
        return lax.rsqrt(jnp.sum(x * x, axis=1, keepdims=True))

    i1 = img1_ref[...].astype(jnp.float32)
    i2 = img2_ref[...].astype(jnp.float32)
    t1 = txt1_ref[...].astype(jnp.float32)
    t2 = txt2_ref[...].astype(jnp.float32)

    # Fused normalize + subtract: never materialize the four normalized
    # (tb, D) copies, only di / dt (halves peak f32 temporaries vs v2).
    di = i2 * inv_norm(i2) - i1 * inv_norm(i1)
    dt = t2 * inv_norm(t2) - t1 * inv_norm(t1)

    dot = jnp.sum(di * dt, axis=1)          # (tb,)
    s_i = jnp.sum(di * di, axis=1)          # ||di||^2
    s_t = jnp.sum(dt * dt, axis=1)          # ||dt||^2

    # F.cosine_similarity: dot / sqrt(clamp_min(s_i * s_t, eps^2))
    cos = dot * lax.rsqrt(jnp.maximum(s_i * s_t, eps_sq))

    # Lane-dense store: one (1, tb) row per tile (wide unmasked vst) instead
    # of a (tb, 1) column of masked partial stores.  Padded rows of a partial
    # edge tile may be Inf/NaN but are never written back (masked writeback).
    out_ref[...] = cos[None, :]


def _vmem_budget_and_limit():
    """~50% of this chip's VMEM for tile sizing, ~75% as the compiler limit."""
    try:
        cap = int(pltpu.get_tpu_info().vmem_capacity_bytes)
    except Exception:
        cap = 64 << 20  # fall back to the most-constrained generation (v7x)
    return cap // 2, (cap * 3) // 4


def _choose_batch_tile(B, D, itemsize, budget):
    """Largest batch tile that fits the budget, rounded to the layout grain.

    Per row: 4 inputs x 2 pipeline buffers x D x itemsize of DMA staging plus
    ~3 live (tb, D) f32 temporaries in the fused kernel (di, dt, one operand).
    When tb < B, tb must be a multiple of 128 because the output tile is the
    lane-dense (1, tb) row; 128 also covers bf16/int8 sublane packing (16/32).
    When B > 128 the tile is capped so the grid has >= 2 steps (both v7x
    TensorCores get work; DMA overlaps compute across steps everywhere).
    """
    per_row = 4 * 2 * D * itemsize + 3 * D * 4
    tb = budget // per_row
    if B > 128:
        two_step = ((B + 1) // 2 + 127) // 128 * 128   # ceil(B/2) -> mult of 128
        tb = min(tb, two_step)
    if tb >= B:
        return B          # full-array block shape is always a legal tile
    # 128-row floor: even for pathological D the 75% vmem_limit leaves headroom.
    return max(128, (tb // 128) * 128)


def directional_similarity(img_embed_one, img_embed_two,
                           txt_embed_one, txt_embed_two):
    """Pallas implementation of DirectionalSimilarity post-encoder math.

    Inputs: four (B, D) raw embedding matrices (pre-normalization), any float
            dtype.  Feed bf16 if the encoders emit f32 — the kernel is
            HBM-bandwidth-bound and upcasts to f32 in-VMEM anyway.
    Output: (B,) float32 directional cosine similarity.
    """
    B, D = img_embed_one.shape
    itemsize = jnp.dtype(img_embed_one.dtype).itemsize
    budget, vmem_limit = _vmem_budget_and_limit()
    tb = _choose_batch_tile(B, D, itemsize, budget)
    grid = (pl.cdiv(B, tb),)

    in_spec = pl.BlockSpec((tb, D), lambda i: (i, 0))
    out = pl.pallas_call(
        _dir_sim_kernel,
        out_shape=jax.ShapeDtypeStruct((1, B), jnp.float32),
        grid_spec=pltpu.PrefetchScalarGridSpec(
            num_scalar_prefetch=0,
            grid=grid,
            in_specs=[in_spec, in_spec, in_spec, in_spec],
            out_specs=pl.BlockSpec((1, tb), lambda i: (0, i)),
        ),
        compiler_params=pltpu.CompilerParams(
            # Batch rows are independent -> v7x's two TensorCores shard the
            # (>=2-step, see _choose_batch_tile) grid; measured no-op on the
            # single-TC v5e/v6e, where tile size is the real lever.
            dimension_semantics=("parallel",),
            vmem_limit_bytes=int(vmem_limit),
        ),
    )(img_embed_one, img_embed_two, txt_embed_one, txt_embed_two)
    return out[0]


def _reference(i1, i2, t1, t2):
    """Pure-JAX reference matching torch F.cosine_similarity semantics."""
    def nrm(x):
        x = x.astype(jnp.float32)
        return x / jnp.linalg.norm(x, axis=1, keepdims=True)
    i1, i2, t1, t2 = nrm(i1), nrm(i2), nrm(t1), nrm(t2)
    di, dt = i2 - i1, t2 - t1
    eps = jnp.float32(1e-8)
    num = jnp.sum(di * dt, axis=1)
    den = jnp.sqrt(
        jnp.maximum(jnp.sum(di * di, axis=1) * jnp.sum(dt * dt, axis=1),
                    eps * eps))
    return num / den


if __name__ == "__main__":
    keys = jax.random.split(jax.random.PRNGKey(0), 8)

    # --- test 1: small f32 batch (single full-array tile) -------------------
    B, D = 8, 128
    img_feat_one = jax.random.normal(keys[0], (B, D), dtype=jnp.float32)
    img_feat_two = jax.random.normal(keys[1], (B, D), dtype=jnp.float32)
    txt_feat_one = jax.random.normal(keys[2], (B, D), dtype=jnp.float32)
    txt_feat_two = jax.random.normal(keys[3], (B, D), dtype=jnp.float32)

    out = jax.block_until_ready(
        directional_similarity(img_feat_one, img_feat_two,
                               txt_feat_one, txt_feat_two))
    ref = _reference(img_feat_one, img_feat_two, txt_feat_one, txt_feat_two)
    assert out.shape == (B,)
    assert jnp.allclose(out, ref, atol=1e-5, rtol=1e-5), (out, ref)

    # --- test 2: multi-tile bf16 batch (>=2 grid steps, 128-row tiles,
    #     lane-dense partial-edge writeback) ---------------------------------
    B2, D2 = 160, 256
    j1 = jax.random.normal(keys[4], (B2, D2), dtype=jnp.float32).astype(jnp.bfloat16)
    j2 = jax.random.normal(keys[5], (B2, D2), dtype=jnp.float32).astype(jnp.bfloat16)
    u1 = jax.random.normal(keys[6], (B2, D2), dtype=jnp.float32).astype(jnp.bfloat16)
    u2 = jax.random.normal(keys[7], (B2, D2), dtype=jnp.float32).astype(jnp.bfloat16)

    out2 = jax.block_until_ready(directional_similarity(j1, j2, u1, u2))
    ref2 = _reference(j1, j2, u1, u2)   # reference also upcasts bf16 -> f32
    assert out2.shape == (B2,)
    assert jnp.allclose(out2, ref2, atol=1e-4, rtol=1e-4), (out2, ref2)

    print("KERNEL_OK")
</pallas_src>

<mosaic_0001>
module attributes {stable_mosaic.version = 11 : i64} {
  func.func @_dir_sim_kernel(%arg0: i32, %arg1: memref<8x128xf32, #tpu.memory_space<vmem>>, %arg2: memref<8x128xf32, #tpu.memory_space<vmem>>, %arg3: memref<8x128xf32, #tpu.memory_space<vmem>>, %arg4: memref<8x128xf32, #tpu.memory_space<vmem>>, %arg5: memref<1x8xf32, #tpu.memory_space<vmem>>) attributes {dimension_semantics = [#tpu.dimension_semantics<parallel>], iteration_bounds = array<i64: 1>, scalar_prefetch = 0 : i64, scratch_operands = 0 : i64, tpu.core_type = #tpu.core_type<tc>, window_params = [{transform_indices = @transform_0, window_bounds = array<i64: 8, 128>}, {transform_indices = @transform_1, window_bounds = array<i64: 8, 128>}, {transform_indices = @transform_2, window_bounds = array<i64: 8, 128>}, {transform_indices = @transform_3, window_bounds = array<i64: 8, 128>}, {transform_indices = @transform_4, window_bounds = array<i64: 1, 8>}]} {
    %c0 = arith.constant 0 : index
    %c0_0 = arith.constant 0 : index
    %0 = vector.load %arg1[%c0, %c0_0] : memref<8x128xf32, #tpu.memory_space<vmem>>, vector<8x128xf32>
    %c0_1 = arith.constant 0 : index
    %c0_2 = arith.constant 0 : index
    %1 = vector.load %arg2[%c0_1, %c0_2] : memref<8x128xf32, #tpu.memory_space<vmem>>, vector<8x128xf32>
    %c0_3 = arith.constant 0 : index
    %c0_4 = arith.constant 0 : index
    %2 = vector.load %arg3[%c0_3, %c0_4] : memref<8x128xf32, #tpu.memory_space<vmem>>, vector<8x128xf32>
    %c0_5 = arith.constant 0 : index
    %c0_6 = arith.constant 0 : index
    %3 = vector.load %arg4[%c0_5, %c0_6] : memref<8x128xf32, #tpu.memory_space<vmem>>, vector<8x128xf32>
    %4 = arith.mulf %1, %1 : vector<8x128xf32>
    %cst = arith.constant dense<0.000000e+00> : vector<8xf32>
    %5 = vector.multi_reduction <add>, %4, %cst [1] : vector<8x128xf32> to vector<8xf32>
    %6 = vector.shape_cast %5 : vector<8xf32> to vector<8x1xf32>
    %7 = math.rsqrt %6 : vector<8x1xf32>
    %8 = vector.broadcast %7 : vector<8x1xf32> to vector<8x128xf32>
    %9 = arith.mulf %1, %8 : vector<8x128xf32>
    %10 = arith.mulf %0, %0 : vector<8x128xf32>
    %cst_7 = arith.constant dense<0.000000e+00> : vector<8xf32>
    %11 = vector.multi_reduction <add>, %10, %cst_7 [1] : vector<8x128xf32> to vector<8xf32>
    %12 = vector.shape_cast %11 : vector<8xf32> to vector<8x1xf32>
    %13 = math.rsqrt %12 : vector<8x1xf32>
    %14 = vector.broadcast %13 : vector<8x1xf32> to vector<8x128xf32>
    %15 = arith.mulf %0, %14 : vector<8x128xf32>
    %16 = arith.subf %9, %15 : vector<8x128xf32>
    %17 = arith.mulf %3, %3 : vector<8x128xf32>
    %cst_8 = arith.constant dense<0.000000e+00> : vector<8xf32>
    %18 = vector.multi_reduction <add>, %17, %cst_8 [1] : vector<8x128xf32> to vector<8xf32>
    %19 = vector.shape_cast %18 : vector<8xf32> to vector<8x1xf32>
    %20 = math.rsqrt %19 : vector<8x1xf32>
    %21 = vector.broadcast %20 : vector<8x1xf32> to vector<8x128xf32>
    %22 = arith.mulf %3, %21 : vector<8x128xf32>
    %23 = arith.mulf %2, %2 : vector<8x128xf32>
    %cst_9 = arith.constant dense<0.000000e+00> : vector<8xf32>
    %24 = vector.multi_reduction <add>, %23, %cst_9 [1] : vector<8x128xf32> to vector<8xf32>
    %25 = vector.shape_cast %24 : vector<8xf32> to vector<8x1xf32>
    %26 = math.rsqrt %25 : vector<8x1xf32>
    %27 = vector.broadcast %26 : vector<8x1xf32> to vector<8x128xf32>
    %28 = arith.mulf %2, %27 : vector<8x128xf32>
    %29 = arith.subf %22, %28 : vector<8x128xf32>
    %30 = arith.mulf %16, %29 : vector<8x128xf32>
    %cst_10 = arith.constant dense<0.000000e+00> : vector<8xf32>
    %31 = vector.multi_reduction <add>, %30, %cst_10 [1] : vector<8x128xf32> to vector<8xf32>
    %32 = arith.mulf %16, %16 : vector<8x128xf32>
    %cst_11 = arith.constant dense<0.000000e+00> : vector<8xf32>
    %33 = vector.multi_reduction <add>, %32, %cst_11 [1] : vector<8x128xf32> to vector<8xf32>
    %34 = arith.mulf %29, %29 : vector<8x128xf32>
    %cst_12 = arith.constant dense<0.000000e+00> : vector<8xf32>
    %35 = vector.multi_reduction <add>, %34, %cst_12 [1] : vector<8x128xf32> to vector<8xf32>
    %36 = arith.mulf %33, %35 : vector<8xf32>
    %cst_13 = arith.constant 1.000000e-16 : f32
    %37 = vector.broadcast %cst_13 : f32 to vector<8xf32>
    %38 = arith.maximumf %36, %37 : vector<8xf32>
    %39 = math.rsqrt %38 : vector<8xf32>
    %40 = arith.mulf %31, %39 : vector<8xf32>
    %41 = vector.shape_cast %40 : vector<8xf32> to vector<1x8xf32>
    %c0_14 = arith.constant 0 : index
    %c0_15 = arith.constant 0 : index
    %42 = vector.load %arg5[%c0_14, %c0_15] : memref<1x8xf32, #tpu.memory_space<vmem>>, vector<1x8xf32>
    tpu.vector_store %arg5[%c0_14, %c0_15], %41 {strides = array<i32>} : memref<1x8xf32, #tpu.memory_space<vmem>>, vector<1x8xf32>,
    return
  }
  func.func @transform_0(%arg0: i32) -> (i32, i32) {
    %c0_i32 = arith.constant 0 : i32
    %c0_i32_0 = arith.constant 0 : i32
    return %arg0, %c0_i32 : i32, i32
  }
  func.func @transform_1(%arg0: i32) -> (i32, i32) {
    %c0_i32 = arith.constant 0 : i32
    %c0_i32_0 = arith.constant 0 : i32
    return %arg0, %c0_i32 : i32, i32
  }
  func.func @transform_2(%arg0: i32) -> (i32, i32) {
    %c0_i32 = arith.constant 0 : i32
    %c0_i32_0 = arith.constant 0 : i32
    return %arg0, %c0_i32 : i32, i32
  }
  func.func @transform_3(%arg0: i32) -> (i32, i32) {
    %c0_i32 = arith.constant 0 : i32
    %c0_i32_0 = arith.constant 0 : i32
    return %arg0, %c0_i32 : i32, i32
  }
  func.func @transform_4(%arg0: i32) -> (i32, i32) {
    %c0_i32 = arith.constant 0 : i32
    %c0_i32_0 = arith.constant 0 : i32
    return %c0_i32, %arg0 : i32, i32
  }
}

</mosaic_0001>

<llo_original>
// kernel: tpu_custom_call.1
$region0: #{tpu_custom_call.1}
  #allocation0 [shape = 'u32[]', space=smem, size = 0x4, offset = 0x4, fixed_abs, tag = 'smem constant byte address 0x4 - core index']
  #allocation1 [shape = 'u32[72,128]{1,0:T(1,128)}', space=vmem, size = 0x9000, scoped, tag = 'internal scratch']
  %s0 = inlined_call_operand.hbm [shape: f32[8,128], index: 0, kind: input, shape index: {}]
  %s1 = inlined_call_operand.hbm [shape: f32[8,128], index: 1, kind: input, shape index: {}]
  %s2 = inlined_call_operand.hbm [shape: f32[8,128], index: 2, kind: input, shape index: {}]
  %s3 = inlined_call_operand.hbm [shape: f32[8,128], index: 3, kind: input, shape index: {}]
  %s4 = inlined_call_operand.hbm [shape: f32[1,8], index: 4, kind: output, shape index: {}]
  %s5 = sld [smem:[#allocation0]]
  $region42: #{tpu_custom_call.1} parent=0
    _
  %s7 = ssub.s32 1, %s5
  %s8 = scalar_select 0, %s7, %s5
  $region1: #{tpu_custom_call.1} parent=0
    #allocation2 [shape = 'u8[4096]{0}', space=vmem, size = 0x1000, scoped, tag = 'input window, operand 0, single buffered']
    #allocation3 [shape = 's32[1]{0}', space=sflag, size = 0x4, scoped, tag = 'scoped memory for tpu_custom_call.1']
    #allocation4 [shape = 's32[1]{0}', space=sflag, size = 0x4, scoped, tag = 'scoped memory for tpu_custom_call.1']
    #allocation5 [shape = 'u8[4096]{0}', space=vmem, size = 0x1000, scoped, tag = 'input window, operand 1, single buffered']
    #allocation6 [shape = 's32[1]{0}', space=sflag, size = 0x4, scoped, tag = 'scoped memory for tpu_custom_call.1']
    #allocation7 [shape = 'u8[4096]{0}', space=vmem, size = 0x1000, scoped, tag = 'input window, operand 2, single buffered']
    #allocation8 [shape = 'u8[4096]{0}', space=vmem, size = 0x1000, scoped, tag = 'input window, operand 3, single buffered']
    #allocation9 [shape = 's32[1]{0}', space=sflag, size = 0x4, scoped, tag = 'scoped memory for tpu_custom_call.1']
    #allocation10 [shape = 'u8[512]{0}', space=vmem, size = 0x400, scoped, tag = 'output window, operand 0, single buffered']
    %9 = vsyncpa [#allocation3], 0
    %10 = vsyncpa [#allocation6], 0
    %11 = vsyncpa [#allocation9], 0
    %12 = vsyncpa [#allocation4], 0
    // Predicated region
    $region2: #{tpu_custom_call.1} parent=1 // pred_check
      _
    $region3: #{tpu_custom_call.1} parent=1 // pred_check_branch
      %14 = sbr.rel (0) target = $region5
    $region4: #{tpu_custom_call.1} parent=1 // pred_region
      %16 = vsyncadd [#allocation3], 0
      %s18 = sshll.u32 %s0, 4
      %s19 = int_to_ptr.hbm [resolvable:$true] %s18
      %s20 = sshll.u32 [#allocation2], 4
      %s21 = int_to_ptr.vmem [resolvable:$true] %s20
      %23 = dma.hbm_to_vmem [thread:$0]  %s19, 128, %s21, [#allocation3]
    $region5: #{tpu_custom_call.1} parent=1 // pred_fallthru
      _
    // Predicated region
    $region6: #{tpu_custom_call.1} parent=1 // pred_check
      _
    $region7: #{tpu_custom_call.1} parent=1 // pred_check_branch
      %25 = sbr.rel (0) target = $region9
    $region8: #{tpu_custom_call.1} parent=1 // pred_region
      %27 = vsyncadd [#allocation6], 0
      %s29 = sshll.u32 %s1, 4
      %s30 = int_to_ptr.hbm [resolvable:$true] %s29
      %s31 = sshll.u32 [#allocation5], 4
      %s32 = int_to_ptr.vmem [resolvable:$true] %s31
      %34 = dma.hbm_to_vmem [thread:$0]  %s30, 128, %s32, [#allocation6]
    $region9: #{tpu_custom_call.1} parent=1 // pred_fallthru
      _
    // Predicated region
    $region10: #{tpu_custom_call.1} parent=1 // pred_check
      _
    $region11: #{tpu_custom_call.1} parent=1 // pred_check_branch
      %36 = sbr.rel (0) target = $region13
    $region12: #{tpu_custom_call.1} parent=1 // pred_region
      %38 = vsyncadd [#allocation6], 0
      %s40 = sshll.u32 %s2, 4
      %s41 = int_to_ptr.hbm [resolvable:$true] %s40
      %s42 = sshll.u32 [#allocation7], 4
      %s43 = int_to_ptr.vmem [resolvable:$true] %s42
      %45 = dma.hbm_to_vmem [thread:$0]  %s41, 128, %s43, [#allocation6]
    $region13: #{tpu_custom_call.1} parent=1 // pred_fallthru
      _
    // Predicated region
    $region14: #{tpu_custom_call.1} parent=1 // pred_check
      _
    $region15: #{tpu_custom_call.1} parent=1 // pred_check_branch
      %47 = sbr.rel (0) target = $region17
    $region16: #{tpu_custom_call.1} parent=1 // pred_region
      %49 = vsyncadd [#allocation9], 0
      %s51 = sshll.u32 %s3, 4
      %s52 = int_to_ptr.hbm [resolvable:$true] %s51
      %s53 = sshll.u32 [#allocation8], 4
      %s54 = int_to_ptr.vmem [resolvable:$true] %s53
      %56 = dma.hbm_to_vmem [thread:$0]  %s52, 128, %s54, [#allocation9]
    $region17: #{tpu_custom_call.1} parent=1 // pred_fallthru
      _
    // Predicated region
    $region18: #{tpu_custom_call.1} parent=1 // pred_check
      _
    $region19: #{tpu_custom_call.1} parent=1 // pred_check_branch
      %58 = sbr.rel (0) target = $region21
    $region20: #{tpu_custom_call.1} parent=1 // pred_region
      %60 = dma.done [#allocation3], 128
    $region21: #{tpu_custom_call.1} parent=1 // pred_fallthru
      _
    // Predicated region
    $region22: #{tpu_custom_call.1} parent=1 // pred_check
      _
    $region23: #{tpu_custom_call.1} parent=1 // pred_check_branch
      %62 = sbr.rel (0) target = $region25
    $region24: #{tpu_custom_call.1} parent=1 // pred_region
      %64 = dma.done [#allocation6], 128
    $region25: #{tpu_custom_call.1} parent=1 // pred_fallthru
      _
    // Predicated region
    $region26: #{tpu_custom_call.1} parent=1 // pred_check
      _
    $region27: #{tpu_custom_call.1} parent=1 // pred_check_branch
      %66 = sbr.rel (0) target = $region29
    $region28: #{tpu_custom_call.1} parent=1 // pred_region
      %68 = dma.done [#allocation6], 128
    $region29: #{tpu_custom_call.1} parent=1 // pred_fallthru
      _
    // Predicated region
    $region30: #{tpu_custom_call.1} parent=1 // pred_check
      _
    $region31: #{tpu_custom_call.1} parent=1 // pred_check_branch
      %70 = sbr.rel (0) target = $region33
    $region32: #{tpu_custom_call.1} parent=1 // pred_region
      %72 = dma.done [#allocation9], 128
    $region33: #{tpu_custom_call.1} parent=1 // pred_fallthru
      _
    %v73 = vld [vmem:[#allocation2] sm:$0xff]
    %v74 = vld [vmem:[#allocation5] sm:$0xff]
    %v75 = vld [vmem:[#allocation7] sm:$0xff]
    %v76 = vld [vmem:[#allocation8] sm:$0xff]
    %v77 = vmul.f32 %v74, %v74
    %78 = vadd.xlane.f32.xlu0 %v77
    %v79 = vpop.xlane.xlu0 %78
    %v80 = vrsqrt.pop %v79
    %v81 = vmul.f32 %v80, %v79
    %v82 = vmul.f32 %v81, %v80
    %v83 = vmul.f32 0.5, %v82
    %v84 = vsub.f32 1.5, %v83
    %v85 = vmul.f32 %v80, %v84
    %vm86 = vweird.f32 %v79
    %vm87 = vweird.f32 %v80
    %vm88 = vmor %vm86, %vm87
    %v89 = vsel %vm88, %v80, %v85
    %v90 = vmul.f32 %v74, %v89
    %v91 = vmul.f32 %v73, %v73
    %92 = vadd.xlane.f32.xlu0 %v91
    %v93 = vpop.xlane.xlu0 %92
    %v94 = vrsqrt.pop %v93
    %v95 = vmul.f32 %v94, %v93
    %v96 = vmul.f32 %v95, %v94
    %v97 = vmul.f32 0.5, %v96
    %v98 = vsub.f32 1.5, %v97
    %v99 = vmul.f32 %v94, %v98
    %vm100 = vweird.f32 %v93
    %vm101 = vweird.f32 %v94
    %vm102 = vmor %vm100, %vm101
    %v103 = vsel %vm102, %v94, %v99
    %v104 = vmul.f32 %v73, %v103
    %v105 = vsub.f32 %v90, %v104
    %v106 = vmul.f32 %v76, %v76
    %107 = vadd.xlane.f32.xlu0 %v106
    %v108 = vpop.xlane.xlu0 %107
    %v109 = vrsqrt.pop %v108
    %v110 = vmul.f32 %v109, %v108
    %v111 = vmul.f32 %v110, %v109
    %v112 = vmul.f32 0.5, %v111
    %v113 = vsub.f32 1.5, %v112
    %v114 = vmul.f32 %v109, %v113
    %vm115 = vweird.f32 %v108
    %vm116 = vweird.f32 %v109
    %vm117 = vmor %vm115, %vm116
    %v118 = vsel %vm117, %v109, %v114
    %v119 = vmul.f32 %v76, %v118
    %v120 = vmul.f32 %v75, %v75
    %121 = vadd.xlane.f32.xlu0 %v120
    %v122 = vpop.xlane.xlu0 %121
    %v123 = vrsqrt.pop %v122
    %v124 = vmul.f32 %v123, %v122
    %v125 = vmul.f32 %v124, %v123
    %v126 = vmul.f32 0.5, %v125
    %v127 = vsub.f32 1.5, %v126
    %v128 = vmul.f32 %v123, %v127
    %vm129 = vweird.f32 %v122
    %vm130 = vweird.f32 %v123
    %vm131 = vmor %vm129, %vm130
    %v132 = vsel %vm131, %v123, %v128
    %v133 = vmul.f32 %v75, %v132
    %v134 = vsub.f32 %v119, %v133
    %v135 = vmul.f32 %v105, %v134
    %136 = vadd.xlane.f32.xlu0 %v135
    %v137 = vpop.xlane.xlu0 %136
    %v138 = vmul.f32 %v105, %v105
    %139 = vadd.xlane.f32.xlu0 %v138
    %v140 = vpop.xlane.xlu0 %139
    %v141 = vmul.f32 %v134, %v134
    %142 = vadd.xlane.f32.xlu0 %v141
    %v143 = vpop.xlane.xlu0 %142
    %v144 = vmul.f32 %v140, %v143
    %v145 = vmax.f32 %v144, 1e-16
    %v146 = vrsqrt.pop %v145
    %v147 = vmul.f32 %v146, %v145
    %v148 = vmul.f32 %v147, %v146
    %v149 = vmul.f32 0.5, %v148
    %v150 = vsub.f32 1.5, %v149
    %v151 = vmul.f32 %v146, %v150
    %vm152 = vweird.f32 %v145
    %vm153 = vweird.f32 %v146
    %vm154 = vmor %vm152, %vm153
    %v155 = vsel %vm154, %v146, %v151
    %v156 = vmul.f32 %v137, %v155
    %v158 = vlaneseq
    %v159 = vand.u32 %v158, 127
    %v160 = vperm.slane %v156, %v159
    %vm162 = vcmask 57344
    %163 = vst.msk [vmem:[#allocation10] sm:$0x1] %vm162, %v160
    // Predicated region
    $region34: #{tpu_custom_call.1} parent=1 // pred_check
      _
    $region35: #{tpu_custom_call.1} parent=1 // pred_check_branch
      %165 = sbr.rel (0) target = $region37
    $region36: #{tpu_custom_call.1} parent=1 // pred_region
      %167 = vsyncadd [#allocation4], 0
      %s169 = sshll.u32 [#allocation10], 4
      %s170 = int_to_ptr.vmem [resolvable:$true] %s169
      %s171 = sshll.u32 %s4, 4
      %s172 = int_to_ptr.hbm [resolvable:$true] %s171
      %174 = dma.vmem_to_hbm [thread:$0]  %s170, 16, %s172, [#allocation4]
    $region37: #{tpu_custom_call.1} parent=1 // pred_fallthru
      _
    // Predicated region
    $region38: #{tpu_custom_call.1} parent=1 // pred_check
      _
    $region39: #{tpu_custom_call.1} parent=1 // pred_check_branch
      %176 = sbr.rel (0) target = $region41
    $region40: #{tpu_custom_call.1} parent=1 // pred_region
      %178 = dma.done [#allocation4], 16
    $region41: #{tpu_custom_call.1} parent=1 // pred_fallthru
      _
    %179 = vsyncpa [#allocation3], 1
    %180 = vsyncpa [#allocation6], 1
    %181 = vsyncpa [#allocation9], 1
    %182 = vsyncpa [#allocation4], 1

</llo_original>
